<compile_context>
chip_gen: v6e
topology: v6e:2x2x1
jax: 0.10.0
libtpu: 0.0.40
codegen_flags: <defaults>
</compile_context>

<pallas_src>
import functools

import jax
import jax.numpy as jnp
from jax.experimental import pallas as pl
from jax.experimental.pallas import tpu as pltpu


def _round_up(n, m):
    return ((n + m - 1) // m) * m


def _batch_tile(B, block_b):
    """Pick the batch tile: full-dim block for tiny batches, otherwise a
    multiple of 8 aiming for ~4 grid steps (v7x megacore), capped at block_b."""
    if B <= 32:
        return B                      # single block; full-dim is always legal
    if B <= block_b:
        return _round_up(-(-B // 4), 8)
    return block_b                    # block_b is a multiple of 8


def qnetwork_kernel(x_ref, w1_ref, b1_ref, w2_ref, b2_ref, o_ref):
    # x_ref:(TB,S)  w1_ref:(S,H)  b1_ref:(1,H)  w2_ref:(H,A)  b2_ref:(1,A)  o_ref:(TB,A)
    x = x_ref[...]
    # Layer 1 (MXU, f32 accum) + resident-bias broadcast + ReLU (VPU, f32).
    h = jnp.dot(x, w1_ref[...], preferred_element_type=jnp.float32) + b1_ref[...]
    h = jnp.maximum(h, 0.0)
    # Layer 2 (MXU) + bias; narrow (num_a-lane) store -- vst slot has plenty of slack.
    y = jnp.dot(h, w2_ref[...], preferred_element_type=jnp.float32) + b2_ref[...]
    o_ref[...] = y.astype(o_ref.dtype)


@functools.partial(jax.jit, static_argnames=("block_b",))
def qnetwork_forward(x, w1, b1, w2, b2, *, block_b=1024):
    """Forward pass. x:(B,num_s), w1:(num_s,H), b1:(1,H), w2:(H,num_a), b2:(1,num_a)."""
    B, num_s = x.shape
    num_hidden = w1.shape[1]
    num_a = w2.shape[1]

    tb = _batch_tile(B, block_b)
    grid = (pl.cdiv(B, tb),)          # ragged last block handled by Pallas masking

    return pl.pallas_call(
        qnetwork_kernel,
        out_shape=jax.ShapeDtypeStruct((B, num_a), jnp.float32),
        grid_spec=pltpu.PrefetchScalarGridSpec(
            num_scalar_prefetch=0,
            grid=grid,
            in_specs=[
                pl.BlockSpec((tb, num_s), lambda i: (i, 0)),          # x: streamed per tile
                pl.BlockSpec((num_s, num_hidden), lambda i: (0, 0)),  # W1: resident
                pl.BlockSpec((1, num_hidden), lambda i: (0, 0)),      # b1: resident
                pl.BlockSpec((num_hidden, num_a), lambda i: (0, 0)),  # W2: resident
                pl.BlockSpec((1, num_a), lambda i: (0, 0)),           # b2: resident
            ],
            out_specs=pl.BlockSpec((tb, num_a), lambda i: (i, 0)),
        ),
        compiler_params=pltpu.CompilerParams(
            dimension_semantics=("parallel",),  # batch tiles independent -> megacore
        ),
    )(x, w1, b1, w2, b2)


def init_qnetwork_params(key, num_s, num_a, num_hidden=128):
    """Deterministic init mirroring nn.Linear defaults: U(-1/sqrt(fan_in), +1/sqrt(fan_in)).
    Layout prep (transpose, 2-D biases) is done once here, never per forward call."""
    k1, k2, k3, k4 = jax.random.split(key, 4)
    bound1 = 1.0 / jnp.sqrt(jnp.float32(num_s))
    bound2 = 1.0 / jnp.sqrt(jnp.float32(num_hidden))
    w1 = jax.random.uniform(k1, (num_s, num_hidden), jnp.float32, -bound1, bound1)
    b1 = jax.random.uniform(k2, (1, num_hidden), jnp.float32, -bound1, bound1)
    w2 = jax.random.uniform(k3, (num_hidden, num_a), jnp.float32, -bound2, bound2)
    b2 = jax.random.uniform(k4, (1, num_a), jnp.float32, -bound2, bound2)
    return w1, b1, w2, b2


if __name__ == "__main__":
    # Shapes implied by the module usage: x = torch.rand(10, 4) -> num_s=4; pick num_a=2.
    B, num_s, num_a, num_hidden = 10, 4, 2, 128

    key = jax.random.PRNGKey(0)
    k_x, k_x2, k_p = jax.random.split(key, 3)
    x = jax.random.uniform(k_x, (B, num_s), jnp.float32)
    w1, b1, w2, b2 = init_qnetwork_params(k_p, num_s, num_a, num_hidden)

    out = qnetwork_forward(x, w1, b1, w2, b2)
    out = jax.block_until_ready(out)

    # Pure-JAX reference of the same math.
    ref = jnp.maximum(x @ w1 + b1, 0.0) @ w2 + b2
    assert out.shape == (B, num_a)
    assert jnp.allclose(out, ref, atol=1e-5), "mismatch vs reference"

    # Exercise the multi-tile / ragged-last-block path (cdiv grid, megacore split).
    B2 = 100
    x2 = jax.random.uniform(k_x2, (B2, num_s), jnp.float32)
    out2 = jax.block_until_ready(qnetwork_forward(x2, w1, b1, w2, b2))
    ref2 = jnp.maximum(x2 @ w1 + b1, 0.0) @ w2 + b2
    assert out2.shape == (B2, num_a)
    assert jnp.allclose(out2, ref2, atol=1e-5), "mismatch vs reference (tiled path)"

    print("KERNEL_OK")
</pallas_src>

<mosaic_0001>
module attributes {stable_mosaic.version = 11 : i64} {
  func.func @qnetwork_kernel(%arg0: i32, %arg1: memref<10x4xf32, #tpu.memory_space<vmem>>, %arg2: memref<4x128xf32, #tpu.memory_space<vmem>>, %arg3: memref<1x128xf32, #tpu.memory_space<vmem>>, %arg4: memref<128x2xf32, #tpu.memory_space<vmem>>, %arg5: memref<1x2xf32, #tpu.memory_space<vmem>>, %arg6: memref<10x2xf32, #tpu.memory_space<vmem>>) attributes {dimension_semantics = [#tpu.dimension_semantics<parallel>], iteration_bounds = array<i64: 1>, scalar_prefetch = 0 : i64, scratch_operands = 0 : i64, tpu.core_type = #tpu.core_type<tc>, window_params = [{transform_indices = @transform_0, window_bounds = array<i64: 10, 4>}, {pipeline_mode = #tpu.pipeline_mode<synchronous>, transform_indices = @transform_1, window_bounds = array<i64: 4, 128>}, {pipeline_mode = #tpu.pipeline_mode<synchronous>, transform_indices = @transform_2, window_bounds = array<i64: 1, 128>}, {pipeline_mode = #tpu.pipeline_mode<synchronous>, transform_indices = @transform_3, window_bounds = array<i64: 128, 2>}, {pipeline_mode = #tpu.pipeline_mode<synchronous>, transform_indices = @transform_4, window_bounds = array<i64: 1, 2>}, {transform_indices = @transform_5, window_bounds = array<i64: 10, 2>}]} {
    %c0 = arith.constant 0 : index
    %c0_0 = arith.constant 0 : index
    %0 = vector.load %arg1[%c0, %c0_0] : memref<10x4xf32, #tpu.memory_space<vmem>>, vector<10x4xf32>
    %c0_1 = arith.constant 0 : index
    %c0_2 = arith.constant 0 : index
    %1 = vector.load %arg2[%c0_1, %c0_2] : memref<4x128xf32, #tpu.memory_space<vmem>>, vector<4x128xf32>
    %cst = arith.constant dense<0.000000e+00> : vector<10x128xf32>
    %2 = tpu.matmul %0, %1, %cst {dimension_numbers = #tpu.dot_dimension_numbers<[1], [0], [0], [1], [0, 0, 1, 1], [], []>} : vector<10x4xf32>, vector<4x128xf32>, vector<10x128xf32> -> vector<10x128xf32>
    %c0_3 = arith.constant 0 : index
    %c0_4 = arith.constant 0 : index
    %3 = vector.load %arg3[%c0_3, %c0_4] : memref<1x128xf32, #tpu.memory_space<vmem>>, vector<1x128xf32>
    %4 = vector.broadcast %3 : vector<1x128xf32> to vector<10x128xf32>
    %5 = arith.addf %2, %4 : vector<10x128xf32>
    %cst_5 = arith.constant 0.000000e+00 : f32
    %6 = vector.broadcast %cst_5 : f32 to vector<10x128xf32>
    %7 = arith.maximumf %5, %6 : vector<10x128xf32>
    %c0_6 = arith.constant 0 : index
    %c0_7 = arith.constant 0 : index
    %8 = vector.load %arg4[%c0_6, %c0_7] : memref<128x2xf32, #tpu.memory_space<vmem>>, vector<128x2xf32>
    %cst_8 = arith.constant dense<0.000000e+00> : vector<10x2xf32>
    %9 = tpu.matmul %7, %8, %cst_8 {dimension_numbers = #tpu.dot_dimension_numbers<[1], [0], [0], [1], [0, 0, 1, 1], [], []>} : vector<10x128xf32>, vector<128x2xf32>, vector<10x2xf32> -> vector<10x2xf32>
    %c0_9 = arith.constant 0 : index
    %c0_10 = arith.constant 0 : index
    %10 = vector.load %arg5[%c0_9, %c0_10] : memref<1x2xf32, #tpu.memory_space<vmem>>, vector<1x2xf32>
    %11 = vector.broadcast %10 : vector<1x2xf32> to vector<10x2xf32>
    %12 = arith.addf %9, %11 : vector<10x2xf32>
    %c0_11 = arith.constant 0 : index
    %c0_12 = arith.constant 0 : index
    %13 = vector.load %arg6[%c0_11, %c0_12] : memref<10x2xf32, #tpu.memory_space<vmem>>, vector<10x2xf32>
    tpu.vector_store %arg6[%c0_11, %c0_12], %12 {strides = array<i32>} : memref<10x2xf32, #tpu.memory_space<vmem>>, vector<10x2xf32>,
    return
  }
  func.func @transform_0(%arg0: i32) -> (i32, i32) {
    %c0_i32 = arith.constant 0 : i32
    %c0_i32_0 = arith.constant 0 : i32
    return %arg0, %c0_i32 : i32, i32
  }
  func.func @transform_1(%arg0: i32) -> (i32, i32) {
    %c0_i32 = arith.constant 0 : i32
    %c0_i32_0 = arith.constant 0 : i32
    %c0_i32_1 = arith.constant 0 : i32
    return %c0_i32, %c0_i32_0 : i32, i32
  }
  func.func @transform_2(%arg0: i32) -> (i32, i32) {
    %c0_i32 = arith.constant 0 : i32
    %c0_i32_0 = arith.constant 0 : i32
    %c0_i32_1 = arith.constant 0 : i32
    return %c0_i32, %c0_i32_0 : i32, i32
  }
  func.func @transform_3(%arg0: i32) -> (i32, i32) {
    %c0_i32 = arith.constant 0 : i32
    %c0_i32_0 = arith.constant 0 : i32
    %c0_i32_1 = arith.constant 0 : i32
    return %c0_i32, %c0_i32_0 : i32, i32
  }
  func.func @transform_4(%arg0: i32) -> (i32, i32) {
    %c0_i32 = arith.constant 0 : i32
    %c0_i32_0 = arith.constant 0 : i32
    %c0_i32_1 = arith.constant 0 : i32
    return %c0_i32, %c0_i32_0 : i32, i32
  }
  func.func @transform_5(%arg0: i32) -> (i32, i32) {
    %c0_i32 = arith.constant 0 : i32
    %c0_i32_0 = arith.constant 0 : i32
    return %arg0, %c0_i32 : i32, i32
  }
}

</mosaic_0001>

<llo_original>
// kernel: qnetwork_forward.1
$region0: #{qnetwork_forward.1}
  #allocation0 [shape = 'u32[]', space=smem, size = 0x4, offset = 0x4, fixed_abs, tag = 'smem constant byte address 0x4 - core index']
  #allocation1 [shape = 'u32[144,128]{1,0:T(1,128)}', space=vmem, size = 0x12000, scoped, tag = 'internal scratch']
  %s0 = inlined_call_operand.vmem [shape: f32[10,4], index: 0, kind: input, shape index: {}]
  %s1 = inlined_call_operand.vmem [shape: f32[4,128], index: 1, kind: input, shape index: {}]
  %s2 = inlined_call_operand.vmem [shape: f32[1,128], index: 2, kind: input, shape index: {}]
  %s3 = inlined_call_operand.vmem [shape: f32[128,2], index: 3, kind: input, shape index: {}]
  %s4 = inlined_call_operand.vmem [shape: f32[1,2], index: 4, kind: input, shape index: {}]
  %s5 = inlined_call_operand.vmem [shape: f32[10,2], index: 5, kind: output, shape index: {}]
  %s6 = sld [smem:[#allocation0]]
  $region30: #{qnetwork_forward.1} parent=0
    _
  %s8 = ssub.s32 1, %s6
  %s9 = scalar_select 0, %s8, %s6
  // Predicated region
  $region2: #{qnetwork_forward.1} parent=0 // pred_check
    _
  $region3: #{qnetwork_forward.1} parent=0 // pred_check_branch
    %11 = sbr.rel (0) target = $region5
  $region4: #{qnetwork_forward.1} parent=0 // pred_region
    _
  $region5: #{qnetwork_forward.1} parent=0 // pred_fallthru
    _
  // Predicated region
  $region6: #{qnetwork_forward.1} parent=0 // pred_check
    _
  $region7: #{qnetwork_forward.1} parent=0 // pred_check_branch
    %13 = sbr.rel (0) target = $region9
  $region8: #{qnetwork_forward.1} parent=0 // pred_region
    _
  $region9: #{qnetwork_forward.1} parent=0 // pred_fallthru
    _
  // Predicated region
  $region10: #{qnetwork_forward.1} parent=0 // pred_check
    _
  $region11: #{qnetwork_forward.1} parent=0 // pred_check_branch
    %15 = sbr.rel (0) target = $region13
  $region12: #{qnetwork_forward.1} parent=0 // pred_region
    _
  $region13: #{qnetwork_forward.1} parent=0 // pred_fallthru
    _
  // Predicated region
  $region14: #{qnetwork_forward.1} parent=0 // pred_check
    _
  $region15: #{qnetwork_forward.1} parent=0 // pred_check_branch
    %17 = sbr.rel (0) target = $region17
  $region16: #{qnetwork_forward.1} parent=0 // pred_region
    _
  $region17: #{qnetwork_forward.1} parent=0 // pred_fallthru
    _
  // Predicated region
  $region18: #{qnetwork_forward.1} parent=0 // pred_check
    _
  $region19: #{qnetwork_forward.1} parent=0 // pred_check_branch
    %19 = sbr.rel (0) target = $region21
  $region20: #{qnetwork_forward.1} parent=0 // pred_region
    _
  $region21: #{qnetwork_forward.1} parent=0 // pred_fallthru
    _
  %v20 = vld [vmem:[%s0] sm:$0xff]
  %v21 = vld [vmem:[%s0 + $0x8] sm:$0x3]
  %v22 = vld [vmem:[%s1] sm:$0xf]
  %v23 = vld [vmem:[%s2] sm:$0x1]
  %v25 = vlaneseq
  %v26 = vshrl.u32 %v25, 7
  %v27 = vsub.s32 0, %v26
  %v28 = vrot.slane %v23, %v27
  %vm30 = vcmask 31744
  %v32 = vsel %vm30, %v20, 0
  %v35 = vsel %vm30, %v21, 0
  %vm37 = vcmask 1043456
  %v39 = vsel %vm37, %v22, 0
  %41 = vmatprep.subr.mxu0 0.0
  %42 = vmatpush1.msra.mxu0 0.0
  %43 = vmatprep.subr.mxu0 0.0
  %44 = vmatpush1.msra.mxu0 0.0
  %45 = vmatprep.subr.mxu0 0.0
  %46 = vmatpush1.msra.mxu0 0.0
  %47 = vmatprep.subr.mxu0 0.0
  %48 = vmatpush1.msra.mxu0 0.0
  %49 = vmatprep.subr.mxu0 0.0
  %50 = vmatpush1.msra.mxu0 0.0
  %51 = vmatprep.subr.mxu0 0.0
  %52 = vmatpush1.msra.mxu0 0.0
  %53 = vmatprep.subr.mxu0 0.0
  %54 = vmatpush1.msra.mxu0 0.0
  %55 = vmatprep.subr.mxu0 0.0
  %56 = vmatpush1.msra.mxu0 0.0
  %57 = vmatprep.subr.mxu0 0.0
  %58 = vmatpush1.msra.mxu0 0.0
  %59 = vmatprep.subr.mxu0 0.0
  %60 = vmatpush1.msra.mxu0 0.0
  %61 = vmatprep.subr.mxu0 0.0
  %62 = vmatpush1.msra.mxu0 0.0
  %63 = vmatprep.subr.mxu0 0.0
  %64 = vmatpush1.msra.mxu0 0.0
  %65 = vmatprep.subr.mxu0 0.0
  %66 = vmatpush1.msra.mxu0 0.0
  %67 = vmatprep.subr.mxu0 0.0
  %68 = vmatpush1.msra.mxu0 0.0
  %69 = vmatprep.subr.mxu0 0.0
  %70 = vmatpush1.msra.mxu0 0.0
  %71 = vmatprep.subr.mxu0 0.0
  %72 = vmatpush1.msra.mxu0 %v39
  %73 = vmatprep.subr.mxu0 0.0
  %74 = vmatpush2.msra.mxu0 0.0
  %75 = vmatprep.subr.mxu0 0.0
  %76 = vmatpush2.msra.mxu0 0.0
  %77 = vmatprep.subr.mxu0 0.0
  %78 = vmatpush2.msra.mxu0 0.0
  %79 = vmatprep.subr.mxu0 0.0
  %80 = vmatpush2.msra.mxu0 0.0
  %81 = vmatprep.subr.mxu0 0.0
  %82 = vmatpush2.msra.mxu0 0.0
  %83 = vmatprep.subr.mxu0 0.0
  %84 = vmatpush2.msra.mxu0 0.0
  %85 = vmatprep.subr.mxu0 0.0
  %86 = vmatpush2.msra.mxu0 0.0
  %87 = vmatprep.subr.mxu0 0.0
  %88 = vmatpush2.msra.mxu0 0.0
  %89 = vmatprep.subr.mxu0 0.0
  %90 = vmatpush2.msra.mxu0 0.0
  %91 = vmatprep.subr.mxu0 0.0
  %92 = vmatpush2.msra.mxu0 0.0
  %93 = vmatprep.subr.mxu0 0.0
  %94 = vmatpush2.msra.mxu0 0.0
  %95 = vmatprep.subr.mxu0 0.0
  %96 = vmatpush2.msra.mxu0 0.0
  %97 = vmatprep.subr.mxu0 0.0
  %98 = vmatpush2.msra.mxu0 0.0
  %99 = vmatprep.subr.mxu0 0.0
  %100 = vmatpush2.msra.mxu0 0.0
  %101 = vmatprep.subr.mxu0 0.0
  %102 = vmatpush2.msra.mxu0 0.0
  %103 = vmatprep.subr.mxu0 0.0
  %104 = vmatpush2.msra.mxu0 0.0
  %105 = vmatprep.mubr.f32.mxu0 0.0
  %106 = vmatmul.mubr.f32.gmra.mxu0 %v32
  %v107 = vpop.f32.mrf.mxu0
  %v108 = vadd.f32 %v28, %v107
  %v109 = vpop.f32.mrf.mxu0
  %110 = vmatprep.mubr.f32.mxu0 0.0
  %111 = vmatmul.mubr.f32.gmra.mxu0 %v35
  %v112 = vpop.f32.mrf.mxu0
  %v113 = vadd.f32 %v28, %v112
  %v114 = vpop.f32.mrf.mxu0
  %115 = vdwg.mxu0
  %v116 = vmax.f32 %v108, 0.0
  %v117 = vmax.f32 %v113, 0.0
  %v118 = vld [vmem:[%s3] sm:$0xff]
  %v119 = vld [vmem:[%s3 + $0x8] sm:$0xff]
  %v120 = vld [vmem:[%s3 + $0x10] sm:$0xff]
  %v121 = vld [vmem:[%s3 + $0x18] sm:$0xff]
  %v122 = vld [vmem:[%s3 + $0x20] sm:$0xff]
  %v123 = vld [vmem:[%s3 + $0x28] sm:$0xff]
  %v124 = vld [vmem:[%s3 + $0x30] sm:$0xff]
  %v125 = vld [vmem:[%s3 + $0x38] sm:$0xff]
  %v126 = vld [vmem:[%s3 + $0x40] sm:$0xff]
  %v127 = vld [vmem:[%s3 + $0x48] sm:$0xff]
  %v128 = vld [vmem:[%s3 + $0x50] sm:$0xff]
  %v129 = vld [vmem:[%s3 + $0x58] sm:$0xff]
  %v130 = vld [vmem:[%s3 + $0x60] sm:$0xff]
  %v131 = vld [vmem:[%s3 + $0x68] sm:$0xff]
  %v132 = vld [vmem:[%s3 + $0x70] sm:$0xff]
  %v133 = vld [vmem:[%s3 + $0x78] sm:$0xff]
  %v134 = vld [vmem:[%s4] sm:$0x1]
  %v136 = vlaneseq
  %v137 = vshrl.u32 %v136, 7
  %v138 = vsub.s32 0, %v137
  %v139 = vrot.slane %v134, %v138
  %141 = vmatprep.subr.mxu0 0.0
  %142 = vmatpush1.msra.mxu0 %v133
  %143 = vmatprep.subr.mxu0 0.0
  %144 = vmatpush1.msra.mxu0 %v132
  %145 = vmatprep.subr.mxu0 0.0
  %146 = vmatpush1.msra.mxu0 %v131
  %147 = vmatprep.subr.mxu0 0.0
  %148 = vmatpush1.msra.mxu0 %v130
  %149 = vmatprep.subr.mxu0 0.0
  %150 = vmatpush1.msra.mxu0 %v129
  %151 = vmatprep.subr.mxu0 0.0
  %152 = vmatpush1.msra.mxu0 %v128
  %153 = vmatprep.subr.mxu0 0.0
  %154 = vmatpush1.msra.mxu0 %v127
  %155 = vmatprep.subr.mxu0 0.0
  %156 = vmatpush1.msra.mxu0 %v126
  %157 = vmatprep.subr.mxu0 0.0
  %158 = vmatpush1.msra.mxu0 %v125
  %159 = vmatprep.subr.mxu0 0.0
  %160 = vmatpush1.msra.mxu0 %v124
  %161 = vmatprep.subr.mxu0 0.0
  %162 = vmatpush1.msra.mxu0 %v123
  %163 = vmatprep.subr.mxu0 0.0
  %164 = vmatpush1.msra.mxu0 %v122
  %165 = vmatprep.subr.mxu0 0.0
  %166 = vmatpush1.msra.mxu0 %v121
  %167 = vmatprep.subr.mxu0 0.0
  %168 = vmatpush1.msra.mxu0 %v120
  %169 = vmatprep.subr.mxu0 0.0
  %170 = vmatpush1.msra.mxu0 %v119
  %171 = vmatprep.subr.mxu0 0.0
  %172 = vmatpush1.msra.mxu0 %v118
  %173 = vmatprep.subr.mxu0 0.0
  %174 = vmatpush2.msra.mxu0 0.0
  %175 = vmatprep.subr.mxu0 0.0
  %176 = vmatpush2.msra.mxu0 0.0
  %177 = vmatprep.subr.mxu0 0.0
  %178 = vmatpush2.msra.mxu0 0.0
  %179 = vmatprep.subr.mxu0 0.0
  %180 = vmatpush2.msra.mxu0 0.0
  %181 = vmatprep.subr.mxu0 0.0
  %182 = vmatpush2.msra.mxu0 0.0
  %183 = vmatprep.subr.mxu0 0.0
  %184 = vmatpush2.msra.mxu0 0.0
  %185 = vmatprep.subr.mxu0 0.0
  %186 = vmatpush2.msra.mxu0 0.0
  %187 = vmatprep.subr.mxu0 0.0
  %188 = vmatpush2.msra.mxu0 0.0
  %189 = vmatprep.subr.mxu0 0.0
  %190 = vmatpush2.msra.mxu0 0.0
  %191 = vmatprep.subr.mxu0 0.0
  %192 = vmatpush2.msra.mxu0 0.0
  %193 = vmatprep.subr.mxu0 0.0
  %194 = vmatpush2.msra.mxu0 0.0
  %195 = vmatprep.subr.mxu0 0.0
  %196 = vmatpush2.msra.mxu0 0.0
  %197 = vmatprep.subr.mxu0 0.0
  %198 = vmatpush2.msra.mxu0 0.0
  %199 = vmatprep.subr.mxu0 0.0
  %200 = vmatpush2.msra.mxu0 0.0
  %201 = vmatprep.subr.mxu0 0.0
  %202 = vmatpush2.msra.mxu0 0.0
  %203 = vmatprep.subr.mxu0 0.0
  %204 = vmatpush2.msra.mxu0 0.0
  %205 = vmatprep.mubr.f32.mxu0 0.0
  %206 = vmatmul.mubr.f32.gmra.mxu0 %v116
  %v207 = vpop.f32.mrf.mxu0
  %v208 = vadd.f32 %v139, %v207
  %v209 = vpop.f32.mrf.mxu0
  %210 = vmatprep.mubr.f32.mxu0 0.0
  %211 = vmatmul.mubr.f32.gmra.mxu0 %v117
  %v212 = vpop.f32.mrf.mxu0
  %v213 = vadd.f32 %v139, %v212
  %v214 = vpop.f32.mrf.mxu0
  %215 = vdwg.mxu0
  %vm216 = vcmask 15360
  %217 = vst.msk [vmem:[%s5] sm:$0xff] %vm216, %v208
  %vm218 = vcmask 9216
  %219 = vst.msk [vmem:[%s5 + $0x8] sm:$0x3] %vm218, %v213
  // Predicated region
  $region22: #{qnetwork_forward.1} parent=0 // pred_check
    _
  $region23: #{qnetwork_forward.1} parent=0 // pred_check_branch
    %221 = sbr.rel (0) target = $region25
  $region24: #{qnetwork_forward.1} parent=0 // pred_region
    _
  $region25: #{qnetwork_forward.1} parent=0 // pred_fallthru
    _
  // Predicated region
  $region26: #{qnetwork_forward.1} parent=0 // pred_check
    _
  $region27: #{qnetwork_forward.1} parent=0 // pred_check_branch
    %223 = sbr.rel (0) target = $region29
  $region28: #{qnetwork_forward.1} parent=0 // pred_region
    _
  $region29: #{qnetwork_forward.1} parent=0 // pred_fallthru
    _

</llo_original>
